<compile_context>
chip_gen: v7x
topology: tpu7x:2x2x1
jax: 0.10.0
libtpu: 0.0.40
codegen_flags: <defaults>
</compile_context>

<pallas_src>
import math
import functools

import jax
import jax.numpy as jnp
from jax import lax
from jax.experimental import pallas as pl
from jax.experimental.pallas import tpu as pltpu


def mha_kernel(x_ref, mask_ref,
               wqkv_ref, wd_ref, bqkv_ref, bd_ref, gamma_ref, beta_ref,
               out_ref,
               q_scr, k_scr, v_scr, hid_scr,
               *, n_heads, block_b, seq_len, ln_eps, compute_dtype,
               mask_per_batch, exact_recip, unroll_heads):
    rows, H = x_ref.shape
    S = seq_len
    Dh = H // n_heads

    # ---- Fused QKV projection: one wide MXU matmul (N = 3H), f32 accumulation.
    #      The 1/sqrt(Dh) scale is pre-folded into the Q columns of wqkv/bqkv.
    x_f32 = x_ref[...].astype(jnp.float32)                  # (rows, H) residual input
    x_c = x_f32.astype(compute_dtype)
    qkv = jnp.dot(x_c, wqkv_ref[...],
                  preferred_element_type=jnp.float32) + bqkv_ref[...]   # (rows, 3H) f32

    # Split once into lane-aligned, head-major scratches so every per-head load in
    # the attention loop starts at lane 0 (no unaligned column slices per head).
    for h in range(n_heads):
        q_scr[h] = qkv[:, h * Dh:(h + 1) * Dh].astype(compute_dtype)
        k_scr[h] = qkv[:, H + h * Dh:H + (h + 1) * Dh].astype(compute_dtype)
        v_scr[h] = qkv[:, 2 * H + h * Dh:2 * H + (h + 1) * Dh].astype(compute_dtype)

    # Hidden accumulator = residual + dense bias; each head then adds ctx_h @ Wd[h]
    # (lane-dense N=H stores -> no masked (S, Dh) column writes, no ctx re-read).
    hid_scr[...] = x_f32 + bd_ref[...]

    shared_mask = None
    if not mask_per_batch:
        shared_mask = mask_ref[0].astype(jnp.float32)        # (S, S), resident

    def attend_one_batch(b, r0):
        mask = (mask_ref[b].astype(jnp.float32) if mask_per_batch else shared_mask)

        def head_body(h, carry):
            qh = q_scr[h, pl.ds(r0, S), :]                   # (S, Dh) compute dtype
            kh = k_scr[h, pl.ds(r0, S), :]
            vh = v_scr[h, pl.ds(r0, S), :]

            # scores = (q / sqrt(Dh)) @ k^T  (scale already folded into q).
            s = lax.dot_general(qh, kh, (((1,), (1,)), ((), ())),
                                preferred_element_type=jnp.float32)
            s = s + mask                                     # (S, S) f32

            # Max-stabilized softmax; f32 exp keeps this v5e-safe.
            m = jnp.max(s, axis=-1, keepdims=True)
            e = jnp.exp(s - m)
            denom = jnp.sum(e, axis=-1, keepdims=True)
            if exact_recip:
                p = e / denom                                # exact for f32 compute path
            else:
                p = e * pl.reciprocal(denom, approx=True)    # EUP slot, bf16 path

            ctx = jnp.dot(p.astype(compute_dtype), vh,
                          preferred_element_type=jnp.float32)           # (S, Dh) f32
            contrib = jnp.dot(ctx.astype(compute_dtype), wd_ref[h],
                              preferred_element_type=jnp.float32)       # (S, H) f32
            hid_scr[pl.ds(r0, S), :] += contrib
            return carry

        lax.fori_loop(0, n_heads, head_body, 0, unroll=unroll_heads)

    if block_b == 1:
        attend_one_batch(0, 0)                               # static row offset
    else:
        def batch_body(b, carry):
            r0 = b * S
            if S % 8 == 0:
                r0 = pl.multiple_of(r0, 8)                   # sublane-aligned hint
            attend_one_batch(b, r0)
            return carry
        lax.fori_loop(0, block_b, batch_body, 0)

    # ---- LayerNorm (f32) on residual + dense output.
    y = hid_scr[...]
    mu = jnp.mean(y, axis=-1, keepdims=True)
    yc = y - mu
    var = jnp.mean(yc * yc, axis=-1, keepdims=True)
    out = yc * lax.rsqrt(var + ln_eps) * gamma_ref[...] + beta_ref[...]
    out_ref[...] = out.astype(out_ref.dtype)


def _pick_block_b(B, S, H, requested):
    """Batch elements per grid step: amortize per-step overhead, keep grid >= 2
    for v7x's two TensorCores, and respect the (8, 128) block-shape rule."""
    if requested is not None:
        bb = max(1, min(int(requested), B))
    else:
        budget = 4 << 20                                     # ~4 MiB f32 activations/step
        bb = max(1, min(B, budget // max(1, S * H * 4)))
        if B >= 2:                                           # leave >= 2 grid steps
            bb = min(bb, max(1, B // 2))
    while B % bb != 0:
        bb -= 1
    # Block row-count must be a multiple of 8 unless it spans the whole B*S axis.
    if (bb * S) % 8 != 0 and bb != B:
        fixed = None
        for d in range(bb, B + 1):
            if B % d == 0 and ((d * S) % 8 == 0 or d == B):
                fixed = d
                break
        bb = fixed if fixed is not None else B
    return bb


def multi_head_attention(x, attention_mask, params, *, n_heads, layer_norm_eps,
                         compute_dtype=jnp.bfloat16, block_b=None,
                         vmem_limit_bytes=None, single_buffer_consts=False):
    """x: (B, S, H) f32. attention_mask: additive mask (1, S, S) or (B, S, S) f32."""
    B, S, H = x.shape
    if H % n_heads != 0:
        raise ValueError("hidden size must be a multiple of n_heads")
    Dh = H // n_heads
    Bm = attention_mask.shape[0]
    assert attention_mask.shape[-2:] == (S, S) and Bm in (1, B)

    cd = jnp.dtype(compute_dtype)
    scale = 1.0 / math.sqrt(Dh)

    bb = _pick_block_b(B, S, H, block_b)
    grid = (B // bb,)
    rows = bb * S

    # Weight prep (all in the wrapper, once):
    #   * fused QKV weight (H, 3H), pre-transposed to (in, out), scale folded into Q,
    #     cast to the MXU compute dtype.
    #   * dense weight pre-split per head -> (n_heads, Dh, H) so the kernel's per-head
    #     row slice is plain first-axis indexing (no dynamic sublane-offset loads).
    wqkv = jnp.concatenate(
        [params["wq"].T * scale, params["wk"].T, params["wv"].T], axis=1).astype(cd)
    bqkv = jnp.concatenate(
        [params["bq"] * scale, params["bk"], params["bv"]],
        axis=0).reshape(1, 3 * H).astype(jnp.float32)
    wd = params["wd"].T.astype(cd).reshape(n_heads, Dh, H)
    bd = params["bd"].reshape(1, H).astype(jnp.float32)
    gamma = params["ln_gamma"].reshape(1, H).astype(jnp.float32)
    beta = params["ln_beta"].reshape(1, H).astype(jnp.float32)

    x2d = x.reshape(B * S, H)                                # free row-major reshape

    mask_per_batch = (Bm != 1)
    if mask_per_batch:
        mask_spec = pl.BlockSpec((bb, S, S), lambda i: (i, 0, 0))
    else:
        mask_spec = pl.BlockSpec((1, S, S), lambda i: (0, 0, 0))  # resident shared mask

    def const_spec(shape):
        idx = lambda i: tuple(0 for _ in shape)
        if single_buffer_consts:
            # v7x (64 MiB VMEM): constants don't need double-buffering.
            return pl.BlockSpec(shape, idx, pipeline_mode=pl.Buffered(1))
        return pl.BlockSpec(shape, idx)

    # Rough VMEM budget so oversized configs fail loudly instead of silently spilling.
    # Capped v7x-safe by default; pass vmem_limit_bytes explicitly to raise on v5e/v6e.
    if vmem_limit_bytes is None:
        pad_dh = -(-Dh // 128) * 128
        mask_rows = bb if mask_per_batch else 1
        est = (4 * rows * H * 4                              # x & out blocks (2x buffered)
               + 2 * mask_rows * S * S * 4                   # mask
               + 2 * 4 * H * H * cd.itemsize                 # wqkv + wd
               + 2 * 6 * H * 4                               # biases + LN params
               + 3 * n_heads * rows * pad_dh * cd.itemsize   # q/k/v scratch (lane padded)
               + rows * H * 4                                # hidden accumulator
               + rows * 3 * H * 4 + 3 * S * S * 4 + 2 * rows * H * 4)  # temporaries
        vmem_limit_bytes = int(min(48 << 20, max(8 << 20, 2 * est)))

    kernel = functools.partial(
        mha_kernel, n_heads=n_heads, block_b=bb, seq_len=S, ln_eps=layer_norm_eps,
        compute_dtype=cd, mask_per_batch=mask_per_batch,
        exact_recip=(cd == jnp.dtype(jnp.float32)),
        unroll_heads=min(n_heads, 4))

    out2d = pl.pallas_call(
        kernel,
        out_shape=jax.ShapeDtypeStruct((B * S, H), x.dtype),
        grid=grid,
        in_specs=[
            pl.BlockSpec((rows, H), lambda i: (i, 0)),       # x (2-D, no staging copy)
            mask_spec,                                       # additive attention mask
            const_spec((H, 3 * H)),                          # fused QKV weight
            const_spec((n_heads, Dh, H)),                    # dense weight, per head
            const_spec((1, 3 * H)),                          # fused QKV bias
            const_spec((1, H)),                              # dense bias
            const_spec((1, H)),                              # LN gamma
            const_spec((1, H)),                              # LN beta
        ],
        out_specs=pl.BlockSpec((rows, H), lambda i: (i, 0)),
        scratch_shapes=[
            pltpu.VMEM((n_heads, rows, Dh), cd),             # q (head-major, lane aligned)
            pltpu.VMEM((n_heads, rows, Dh), cd),             # k
            pltpu.VMEM((n_heads, rows, Dh), cd),             # v
            pltpu.VMEM((rows, H), jnp.float32),              # hidden accumulator
        ],
        compiler_params=pltpu.CompilerParams(
            dimension_semantics=("parallel",),
            vmem_limit_bytes=vmem_limit_bytes),
    )(x2d, attention_mask, wqkv, wd, bqkv, bd, gamma, beta)

    return out2d.reshape(B, S, H)


def reference_mha(x, attention_mask, params, *, n_heads, layer_norm_eps):
    """Pure-JAX reference mirroring the PyTorch forward (eval mode)."""
    B, S, H = x.shape
    Dh = H // n_heads

    def linear(inp, w, b):  # w: (out, in) like torch
        return jnp.einsum("bsh,oh->bso", inp, w) + b

    q = linear(x, params["wq"], params["bq"])
    k = linear(x, params["wk"], params["bk"])
    v = linear(x, params["wv"], params["bv"])

    def split(t):
        return t.reshape(B, S, n_heads, Dh).transpose(0, 2, 1, 3)

    qh, kh, vh = split(q), split(k), split(v)
    scores = jnp.einsum("bhqd,bhkd->bhqk", qh, kh) / math.sqrt(Dh)
    scores = scores + attention_mask[:, None, :, :]
    probs = jax.nn.softmax(scores, axis=-1)
    ctx = jnp.einsum("bhqk,bhkd->bhqd", probs, vh)
    ctx = ctx.transpose(0, 2, 1, 3).reshape(B, S, H)
    hidden = jnp.einsum("bsh,oh->bso", ctx, params["wd"]) + params["bd"]
    y = hidden + x
    mu = jnp.mean(y, axis=-1, keepdims=True)
    var = jnp.mean((y - mu) ** 2, axis=-1, keepdims=True)
    y_norm = (y - mu) / jnp.sqrt(var + layer_norm_eps)
    return y_norm * params["ln_gamma"] + params["ln_beta"]


if __name__ == "__main__":
    B, S, H = 2, 8, 32
    n_heads = 2
    layer_norm_eps = 1e-12

    key = jax.random.PRNGKey(0)
    ks = jax.random.split(key, 9)

    def lin_init(kw, kb, fan_in, shape_w):
        bound = 1.0 / math.sqrt(fan_in)
        w = jax.random.uniform(kw, shape_w, jnp.float32, -bound, bound)
        b = jax.random.uniform(kb, (shape_w[0],), jnp.float32, -bound, bound)
        return w, b

    wq, bq = lin_init(ks[0], ks[1], H, (H, H))
    wk, bk = lin_init(ks[2], ks[3], H, (H, H))
    wv, bv = lin_init(ks[4], ks[5], H, (H, H))
    wd, bd = lin_init(ks[6], ks[7], H, (H, H))
    params = dict(wq=wq, bq=bq, wk=wk, bk=bk, wv=wv, bv=bv, wd=wd, bd=bd,
                  ln_gamma=jnp.ones((H,), jnp.float32),
                  ln_beta=jnp.zeros((H,), jnp.float32))

    x = jax.random.normal(ks[8], (B, S, H), jnp.float32)

    # Causal additive mask (SASRec style): 0 where attended, -10000 where masked.
    causal = jnp.tril(jnp.ones((S, S), jnp.float32))
    mask_shared = ((1.0 - causal) * -10000.0)[None]          # (1, S, S), batch-invariant

    ref = reference_mha(x, mask_shared, params,
                        n_heads=n_heads, layer_norm_eps=layer_norm_eps)

    # 1) Default path: bf16 MXU operands, auto block_b (grid of 2 steps), shared mask.
    out_bf16 = multi_head_attention(x, mask_shared, params,
                                    n_heads=n_heads, layer_norm_eps=layer_norm_eps)
    out_bf16 = jax.block_until_ready(out_bf16)
    assert out_bf16.shape == (B, S, H)
    assert jnp.allclose(out_bf16, ref, atol=5e-2, rtol=5e-2), "bf16 mismatch vs reference"

    # 2) f32 compute path, per-batch mask, batch-blocked grid step (block_b=2).
    mask_per_batch = jnp.broadcast_to(mask_shared, (B, S, S))
    out_f32 = multi_head_attention(x, mask_per_batch, params,
                                   n_heads=n_heads, layer_norm_eps=layer_norm_eps,
                                   compute_dtype=jnp.float32, block_b=2)
    out_f32 = jax.block_until_ready(out_f32)
    assert jnp.allclose(out_f32, ref, atol=1e-3, rtol=1e-3), "f32 mismatch vs reference"

    # 3) bf16 path with explicit batch blocking and the shared resident mask.
    out_blk = multi_head_attention(x, mask_shared, params,
                                   n_heads=n_heads, layer_norm_eps=layer_norm_eps,
                                   block_b=2)
    out_blk = jax.block_until_ready(out_blk)
    assert jnp.allclose(out_blk, ref, atol=5e-2, rtol=5e-2), "blocked bf16 mismatch"

    print("KERNEL_OK")
</pallas_src>

<mosaic_0001>
module attributes {stable_mosaic.version = 11 : i64} {
  func.func @mha_kernel(%arg0: i32, %arg1: memref<8x32xf32, #tpu.memory_space<vmem>>, %arg2: memref<1x8x8xf32, #tpu.memory_space<vmem>>, %arg3: memref<32x96xbf16, #tpu.memory_space<vmem>>, %arg4: memref<2x16x32xbf16, #tpu.memory_space<vmem>>, %arg5: memref<1x96xf32, #tpu.memory_space<vmem>>, %arg6: memref<1x32xf32, #tpu.memory_space<vmem>>, %arg7: memref<1x32xf32, #tpu.memory_space<vmem>>, %arg8: memref<1x32xf32, #tpu.memory_space<vmem>>, %arg9: memref<8x32xf32, #tpu.memory_space<vmem>>, %arg10: memref<2x8x16xbf16, #tpu.memory_space<vmem>>, %arg11: memref<2x8x16xbf16, #tpu.memory_space<vmem>>, %arg12: memref<2x8x16xbf16, #tpu.memory_space<vmem>>, %arg13: memref<8x32xf32, #tpu.memory_space<vmem>>) attributes {dimension_semantics = [#tpu.dimension_semantics<parallel>], iteration_bounds = array<i64: 2>, scalar_prefetch = 0 : i64, scratch_operands = 4 : i64, tpu.core_type = #tpu.core_type<tc>, window_params = [{transform_indices = @transform_0, window_bounds = array<i64: 8, 32>}, {pipeline_mode = #tpu.pipeline_mode<synchronous>, transform_indices = @transform_1, window_bounds = array<i64: 1, 8, 8>}, {pipeline_mode = #tpu.pipeline_mode<synchronous>, transform_indices = @transform_2, window_bounds = array<i64: 32, 96>}, {pipeline_mode = #tpu.pipeline_mode<synchronous>, transform_indices = @transform_3, window_bounds = array<i64: 2, 16, 32>}, {pipeline_mode = #tpu.pipeline_mode<synchronous>, transform_indices = @transform_4, window_bounds = array<i64: 1, 96>}, {pipeline_mode = #tpu.pipeline_mode<synchronous>, transform_indices = @transform_5, window_bounds = array<i64: 1, 32>}, {pipeline_mode = #tpu.pipeline_mode<synchronous>, transform_indices = @transform_6, window_bounds = array<i64: 1, 32>}, {pipeline_mode = #tpu.pipeline_mode<synchronous>, transform_indices = @transform_7, window_bounds = array<i64: 1, 32>}, {transform_indices = @transform_8, window_bounds = array<i64: 8, 32>}]} {
    %c0 = arith.constant 0 : index
    %c0_0 = arith.constant 0 : index
    %0 = vector.load %arg1[%c0, %c0_0] : memref<8x32xf32, #tpu.memory_space<vmem>>, vector<8x32xf32>
    %1 = arith.truncf %0 : vector<8x32xf32> to vector<8x32xbf16>
    %c0_1 = arith.constant 0 : index
    %c0_2 = arith.constant 0 : index
    %2 = vector.load %arg3[%c0_1, %c0_2] : memref<32x96xbf16, #tpu.memory_space<vmem>>, vector<32x96xbf16>
    %cst = arith.constant dense<0.000000e+00> : vector<8x96xf32>
    %3 = tpu.matmul %1, %2, %cst {dimension_numbers = #tpu.dot_dimension_numbers<[1], [0], [0], [1], [0, 0, 1, 1], [], []>} : vector<8x32xbf16>, vector<32x96xbf16>, vector<8x96xf32> -> vector<8x96xf32>
    %c0_3 = arith.constant 0 : index
    %c0_4 = arith.constant 0 : index
    %4 = vector.load %arg5[%c0_3, %c0_4] : memref<1x96xf32, #tpu.memory_space<vmem>>, vector<1x96xf32>
    %5 = vector.broadcast %4 : vector<1x96xf32> to vector<8x96xf32>
    %6 = arith.addf %3, %5 : vector<8x96xf32>
    %7 = vector.extract_strided_slice %6 {offsets = [0, 0], sizes = [8, 16], strides = [1, 1]} : vector<8x96xf32> to vector<8x16xf32>
    %8 = arith.truncf %7 : vector<8x16xf32> to vector<8x16xbf16>
    %c0_5 = arith.constant 0 : index
    %c0_6 = arith.constant 0 : index
    %c0_7 = arith.constant 0 : index
    %9 = vector.load %arg10[%c0_5, %c0_6, %c0_7] : memref<2x8x16xbf16, #tpu.memory_space<vmem>>, vector<1x8x16xbf16>
    %10 = vector.shape_cast %9 : vector<1x8x16xbf16> to vector<8x16xbf16>
    %11 = vector.shape_cast %8 : vector<8x16xbf16> to vector<1x8x16xbf16>
    tpu.vector_store %arg10[%c0_5, %c0_6, %c0_7], %11 {strides = array<i32>} : memref<2x8x16xbf16, #tpu.memory_space<vmem>>, vector<1x8x16xbf16>,
    %12 = vector.extract_strided_slice %6 {offsets = [0, 32], sizes = [8, 16], strides = [1, 1]} : vector<8x96xf32> to vector<8x16xf32>
    %13 = arith.truncf %12 : vector<8x16xf32> to vector<8x16xbf16>
    %c0_8 = arith.constant 0 : index
    %c0_9 = arith.constant 0 : index
    %c0_10 = arith.constant 0 : index
    %14 = vector.load %arg11[%c0_8, %c0_9, %c0_10] : memref<2x8x16xbf16, #tpu.memory_space<vmem>>, vector<1x8x16xbf16>
    %15 = vector.shape_cast %14 : vector<1x8x16xbf16> to vector<8x16xbf16>
    %16 = vector.shape_cast %13 : vector<8x16xbf16> to vector<1x8x16xbf16>
    tpu.vector_store %arg11[%c0_8, %c0_9, %c0_10], %16 {strides = array<i32>} : memref<2x8x16xbf16, #tpu.memory_space<vmem>>, vector<1x8x16xbf16>,
    %17 = vector.extract_strided_slice %6 {offsets = [0, 64], sizes = [8, 16], strides = [1, 1]} : vector<8x96xf32> to vector<8x16xf32>
    %18 = arith.truncf %17 : vector<8x16xf32> to vector<8x16xbf16>
    %c0_11 = arith.constant 0 : index
    %c0_12 = arith.constant 0 : index
    %c0_13 = arith.constant 0 : index
    %19 = vector.load %arg12[%c0_11, %c0_12, %c0_13] : memref<2x8x16xbf16, #tpu.memory_space<vmem>>, vector<1x8x16xbf16>
    %20 = vector.shape_cast %19 : vector<1x8x16xbf16> to vector<8x16xbf16>
    %21 = vector.shape_cast %18 : vector<8x16xbf16> to vector<1x8x16xbf16>
    tpu.vector_store %arg12[%c0_11, %c0_12, %c0_13], %21 {strides = array<i32>} : memref<2x8x16xbf16, #tpu.memory_space<vmem>>, vector<1x8x16xbf16>,
    %22 = vector.extract_strided_slice %6 {offsets = [0, 16], sizes = [8, 16], strides = [1, 1]} : vector<8x96xf32> to vector<8x16xf32>
    %23 = arith.truncf %22 : vector<8x16xf32> to vector<8x16xbf16>
    %c1 = arith.constant 1 : index
    %c0_14 = arith.constant 0 : index
    %c0_15 = arith.constant 0 : index
    %24 = vector.load %arg10[%c1, %c0_14, %c0_15] : memref<2x8x16xbf16, #tpu.memory_space<vmem>>, vector<1x8x16xbf16>
    %25 = vector.shape_cast %24 : vector<1x8x16xbf16> to vector<8x16xbf16>
    %26 = vector.shape_cast %23 : vector<8x16xbf16> to vector<1x8x16xbf16>
    tpu.vector_store %arg10[%c1, %c0_14, %c0_15], %26 {strides = array<i32>} : memref<2x8x16xbf16, #tpu.memory_space<vmem>>, vector<1x8x16xbf16>,
    %27 = vector.extract_strided_slice %6 {offsets = [0, 48], sizes = [8, 16], strides = [1, 1]} : vector<8x96xf32> to vector<8x16xf32>
    %28 = arith.truncf %27 : vector<8x16xf32> to vector<8x16xbf16>
    %c1_16 = arith.constant 1 : index
    %c0_17 = arith.constant 0 : index
    %c0_18 = arith.constant 0 : index
    %29 = vector.load %arg11[%c1_16, %c0_17, %c0_18] : memref<2x8x16xbf16, #tpu.memory_space<vmem>>, vector<1x8x16xbf16>
    %30 = vector.shape_cast %29 : vector<1x8x16xbf16> to vector<8x16xbf16>
    %31 = vector.shape_cast %28 : vector<8x16xbf16> to vector<1x8x16xbf16>
    tpu.vector_store %arg11[%c1_16, %c0_17, %c0_18], %31 {strides = array<i32>} : memref<2x8x16xbf16, #tpu.memory_space<vmem>>, vector<1x8x16xbf16>,
    %32 = vector.extract_strided_slice %6 {offsets = [0, 80], sizes = [8, 16], strides = [1, 1]} : vector<8x96xf32> to vector<8x16xf32>
    %33 = arith.truncf %32 : vector<8x16xf32> to vector<8x16xbf16>
    %c1_19 = arith.constant 1 : index
    %c0_20 = arith.constant 0 : index
    %c0_21 = arith.constant 0 : index
    %34 = vector.load %arg12[%c1_19, %c0_20, %c0_21] : memref<2x8x16xbf16, #tpu.memory_space<vmem>>, vector<1x8x16xbf16>
    %35 = vector.shape_cast %34 : vector<1x8x16xbf16> to vector<8x16xbf16>
    %36 = vector.shape_cast %33 : vector<8x16xbf16> to vector<1x8x16xbf16>
    tpu.vector_store %arg12[%c1_19, %c0_20, %c0_21], %36 {strides = array<i32>} : memref<2x8x16xbf16, #tpu.memory_space<vmem>>, vector<1x8x16xbf16>,
    %c0_22 = arith.constant 0 : index
    %c0_23 = arith.constant 0 : index
    %37 = vector.load %arg6[%c0_22, %c0_23] : memref<1x32xf32, #tpu.memory_space<vmem>>, vector<1x32xf32>
    %38 = vector.broadcast %37 : vector<1x32xf32> to vector<8x32xf32>
    %39 = arith.addf %0, %38 : vector<8x32xf32>
    %c0_24 = arith.constant 0 : index
    %c0_25 = arith.constant 0 : index
    %40 = vector.load %arg13[%c0_24, %c0_25] : memref<8x32xf32, #tpu.memory_space<vmem>>, vector<8x32xf32>
    tpu.vector_store %arg13[%c0_24, %c0_25], %39 {strides = array<i32>} : memref<8x32xf32, #tpu.memory_space<vmem>>, vector<8x32xf32>,
    %c0_26 = arith.constant 0 : index
    %c0_27 = arith.constant 0 : index
    %c0_28 = arith.constant 0 : index
    %41 = vector.load %arg2[%c0_26, %c0_27, %c0_28] : memref<1x8x8xf32, #tpu.memory_space<vmem>>, vector<1x8x8xf32>
    %42 = vector.shape_cast %41 : vector<1x8x8xf32> to vector<8x8xf32>
    %c0_i32 = arith.constant 0 : i32
    %43 = arith.index_cast %c0_i32 : i32 to index
    %c0_29 = arith.constant 0 : index
    %c0_30 = arith.constant 0 : index
    %44 = vector.load %arg10[%43, %c0_29, %c0_30] : memref<2x8x16xbf16, #tpu.memory_space<vmem>>, vector<1x8x16xbf16>
    %45 = vector.shape_cast %44 : vector<1x8x16xbf16> to vector<8x16xbf16>
    %46 = arith.index_cast %c0_i32 : i32 to index
    %c0_31 = arith.constant 0 : index
    %c0_32 = arith.constant 0 : index
    %47 = vector.load %arg11[%46, %c0_31, %c0_32] : memref<2x8x16xbf16, #tpu.memory_space<vmem>>, vector<1x8x16xbf16>
    %48 = vector.shape_cast %47 : vector<1x8x16xbf16> to vector<8x16xbf16>
    %49 = arith.index_cast %c0_i32 : i32 to index
    %c0_33 = arith.constant 0 : index
    %c0_34 = arith.constant 0 : index
    %50 = vector.load %arg12[%49, %c0_33, %c0_34] : memref<2x8x16xbf16, #tpu.memory_space<vmem>>, vector<1x8x16xbf16>
    %51 = vector.shape_cast %50 : vector<1x8x16xbf16> to vector<8x16xbf16>
    %cst_35 = arith.constant dense<0.000000e+00> : vector<8x8xf32>
    %52 = tpu.matmul %45, %48, %cst_35 {dimension_numbers = #tpu.dot_dimension_numbers<[1], [1], [0], [0], [0, 0, 1, 0], [], []>} : vector<8x16xbf16>, vector<8x16xbf16>, vector<8x8xf32> -> vector<8x8xf32>
    %53 = arith.addf %52, %42 : vector<8x8xf32>
    %cst_36 = arith.constant dense<0xFF800000> : vector<8xf32>
    %54 = vector.multi_reduction <maximumf>, %53, %cst_36 [1] : vector<8x8xf32> to vector<8xf32>
    %55 = vector.shape_cast %54 : vector<8xf32> to vector<8x1xf32>
    %56 = vector.broadcast %55 : vector<8x1xf32> to vector<8x8xf32>
    %57 = arith.subf %53, %56 : vector<8x8xf32>
    %58 = math.exp %57 : vector<8x8xf32>
    %cst_37 = arith.constant dense<0.000000e+00> : vector<8xf32>
    %59 = vector.multi_reduction <add>, %58, %cst_37 [1] : vector<8x8xf32> to vector<8xf32>
    %60 = vector.shape_cast %59 : vector<8xf32> to vector<8x1xf32>
    %61 = tpu.reciprocal %60 {approx = true} : vector<8x1xf32> -> vector<8x1xf32>
    %62 = vector.broadcast %61 : vector<8x1xf32> to vector<8x8xf32>
    %63 = arith.mulf %58, %62 : vector<8x8xf32>
    %64 = arith.truncf %63 : vector<8x8xf32> to vector<8x8xbf16>
    %cst_38 = arith.constant dense<0.000000e+00> : vector<8x16xf32>
    %65 = tpu.matmul %64, %51, %cst_38 {dimension_numbers = #tpu.dot_dimension_numbers<[1], [0], [0], [1], [0, 0, 1, 1], [], []>} : vector<8x8xbf16>, vector<8x16xbf16>, vector<8x16xf32> -> vector<8x16xf32>
    %66 = arith.truncf %65 : vector<8x16xf32> to vector<8x16xbf16>
    %67 = arith.index_cast %c0_i32 : i32 to index
    %c0_39 = arith.constant 0 : index
    %c0_40 = arith.constant 0 : index
    %68 = vector.load %arg4[%67, %c0_39, %c0_40] : memref<2x16x32xbf16, #tpu.memory_space<vmem>>, vector<1x16x32xbf16>
    %69 = vector.shape_cast %68 : vector<1x16x32xbf16> to vector<16x32xbf16>
    %cst_41 = arith.constant dense<0.000000e+00> : vector<8x32xf32>
    %70 = tpu.matmul %66, %69, %cst_41 {dimension_numbers = #tpu.dot_dimension_numbers<[1], [0], [0], [1], [0, 0, 1, 1], [], []>} : vector<8x16xbf16>, vector<16x32xbf16>, vector<8x32xf32> -> vector<8x32xf32>
    %c0_42 = arith.constant 0 : index
    %c0_43 = arith.constant 0 : index
    %71 = vector.load %arg13[%c0_42, %c0_43] : memref<8x32xf32, #tpu.memory_space<vmem>>, vector<8x32xf32>
    %72 = arith.addf %71, %70 : vector<8x32xf32>
    %c0_44 = arith.constant 0 : index
    %c0_45 = arith.constant 0 : index
    %73 = vector.load %arg13[%c0_44, %c0_45] : memref<8x32xf32, #tpu.memory_space<vmem>>, vector<8x32xf32>
    tpu.vector_store %arg13[%c0_44, %c0_45], %72 {strides = array<i32>} : memref<8x32xf32, #tpu.memory_space<vmem>>, vector<8x32xf32>,
    %c1_i32 = arith.constant 1 : i32
    %74 = arith.index_cast %c1_i32 : i32 to index
    %c0_46 = arith.constant 0 : index
    %c0_47 = arith.constant 0 : index
    %75 = vector.load %arg10[%74, %c0_46, %c0_47] : memref<2x8x16xbf16, #tpu.memory_space<vmem>>, vector<1x8x16xbf16>
    %76 = vector.shape_cast %75 : vector<1x8x16xbf16> to vector<8x16xbf16>
    %77 = arith.index_cast %c1_i32 : i32 to index
    %c0_48 = arith.constant 0 : index
    %c0_49 = arith.constant 0 : index
    %78 = vector.load %arg11[%77, %c0_48, %c0_49] : memref<2x8x16xbf16, #tpu.memory_space<vmem>>, vector<1x8x16xbf16>
    %79 = vector.shape_cast %78 : vector<1x8x16xbf16> to vector<8x16xbf16>
    %80 = arith.index_cast %c1_i32 : i32 to index
    %c0_50 = arith.constant 0 : index
    %c0_51 = arith.constant 0 : index
    %81 = vector.load %arg12[%80, %c0_50, %c0_51] : memref<2x8x16xbf16, #tpu.memory_space<vmem>>, vector<1x8x16xbf16>
    %82 = vector.shape_cast %81 : vector<1x8x16xbf16> to vector<8x16xbf16>
    %cst_52 = arith.constant dense<0.000000e+00> : vector<8x8xf32>
    %83 = tpu.matmul %76, %79, %cst_52 {dimension_numbers = #tpu.dot_dimension_numbers<[1], [1], [0], [0], [0, 0, 1, 0], [], []>} : vector<8x16xbf16>, vector<8x16xbf16>, vector<8x8xf32> -> vector<8x8xf32>
    %84 = arith.addf %83, %42 : vector<8x8xf32>
    %cst_53 = arith.constant dense<0xFF800000> : vector<8xf32>
    %85 = vector.multi_reduction <maximumf>, %84, %cst_53 [1] : vector<8x8xf32> to vector<8xf32>
    %86 = vector.shape_cast %85 : vector<8xf32> to vector<8x1xf32>
    %87 = vector.broadcast %86 : vector<8x1xf32> to vector<8x8xf32>
    %88 = arith.subf %84, %87 : vector<8x8xf32>
    %89 = math.exp %88 : vector<8x8xf32>
    %cst_54 = arith.constant dense<0.000000e+00> : vector<8xf32>
    %90 = vector.multi_reduction <add>, %89, %cst_54 [1] : vector<8x8xf32> to vector<8xf32>
    %91 = vector.shape_cast %90 : vector<8xf32> to vector<8x1xf32>
    %92 = tpu.reciprocal %91 {approx = true} : vector<8x1xf32> -> vector<8x1xf32>
    %93 = vector.broadcast %92 : vector<8x1xf32> to vector<8x8xf32>
    %94 = arith.mulf %89, %93 : vector<8x8xf32>
    %95 = arith.truncf %94 : vector<8x8xf32> to vector<8x8xbf16>
    %cst_55 = arith.constant dense<0.000000e+00> : vector<8x16xf32>
    %96 = tpu.matmul %95, %82, %cst_55 {dimension_numbers = #tpu.dot_dimension_numbers<[1], [0], [0], [1], [0, 0, 1, 1], [], []>} : vector<8x8xbf16>, vector<8x16xbf16>, vector<8x16xf32> -> vector<8x16xf32>
    %97 = arith.truncf %96 : vector<8x16xf32> to vector<8x16xbf16>
    %98 = arith.index_cast %c1_i32 : i32 to index
    %c0_56 = arith.constant 0 : index
    %c0_57 = arith.constant 0 : index
    %99 = vector.load %arg4[%98, %c0_56, %c0_57] : memref<2x16x32xbf16, #tpu.memory_space<vmem>>, vector<1x16x32xbf16>
    %100 = vector.shape_cast %99 : vector<1x16x32xbf16> to vector<16x32xbf16>
    %cst_58 = arith.constant dense<0.000000e+00> : vector<8x32xf32>
    %101 = tpu.matmul %97, %100, %cst_58 {dimension_numbers = #tpu.dot_dimension_numbers<[1], [0], [0], [1], [0, 0, 1, 1], [], []>} : vector<8x16xbf16>, vector<16x32xbf16>, vector<8x32xf32> -> vector<8x32xf32>
    %c0_59 = arith.constant 0 : index
    %c0_60 = arith.constant 0 : index
    %102 = vector.load %arg13[%c0_59, %c0_60] : memref<8x32xf32, #tpu.memory_space<vmem>>, vector<8x32xf32>
    %103 = arith.addf %102, %101 : vector<8x32xf32>
    %c0_61 = arith.constant 0 : index
    %c0_62 = arith.constant 0 : index
    %104 = vector.load %arg13[%c0_61, %c0_62] : memref<8x32xf32, #tpu.memory_space<vmem>>, vector<8x32xf32>
    tpu.vector_store %arg13[%c0_61, %c0_62], %103 {strides = array<i32>} : memref<8x32xf32, #tpu.memory_space<vmem>>, vector<8x32xf32>,
    %c2_i32 = arith.constant 2 : i32
    %c0_63 = arith.constant 0 : index
    %c0_64 = arith.constant 0 : index
    %105 = vector.load %arg13[%c0_63, %c0_64] : memref<8x32xf32, #tpu.memory_space<vmem>>, vector<8x32xf32>
    %cst_65 = arith.constant dense<0.000000e+00> : vector<8xf32>
    %106 = vector.multi_reduction <add>, %105, %cst_65 [1] : vector<8x32xf32> to vector<8xf32>
    %107 = vector.shape_cast %106 : vector<8xf32> to vector<8x1xf32>
    %cst_66 = arith.constant 3.200000e+01 : f32
    %108 = vector.broadcast %cst_66 : f32 to vector<8x1xf32>
    %109 = arith.divf %107, %108 : vector<8x1xf32>
    %110 = vector.broadcast %109 : vector<8x1xf32> to vector<8x32xf32>
    %111 = arith.subf %105, %110 : vector<8x32xf32>
    %112 = arith.mulf %111, %111 : vector<8x32xf32>
    %cst_67 = arith.constant dense<0.000000e+00> : vector<8xf32>
    %113 = vector.multi_reduction <add>, %112, %cst_67 [1] : vector<8x32xf32> to vector<8xf32>
    %114 = vector.shape_cast %113 : vector<8xf32> to vector<8x1xf32>
    %cst_68 = arith.constant 3.200000e+01 : f32
    %115 = vector.broadcast %cst_68 : f32 to vector<8x1xf32>
    %116 = arith.divf %114, %115 : vector<8x1xf32>
    %cst_69 = arith.constant 9.99999996E-13 : f32
    %117 = vector.broadcast %cst_69 : f32 to vector<8x1xf32>
    %118 = arith.addf %116, %117 : vector<8x1xf32>
    %119 = math.rsqrt %118 : vector<8x1xf32>
    %120 = vector.broadcast %119 : vector<8x1xf32> to vector<8x32xf32>
    %121 = arith.mulf %111, %120 : vector<8x32xf32>
    %c0_70 = arith.constant 0 : index
    %c0_71 = arith.constant 0 : index
    %122 = vector.load %arg7[%c0_70, %c0_71] : memref<1x32xf32, #tpu.memory_space<vmem>>, vector<1x32xf32>
    %123 = vector.broadcast %122 : vector<1x32xf32> to vector<8x32xf32>
    %124 = arith.mulf %121, %123 : vector<8x32xf32>
    %c0_72 = arith.constant 0 : index
    %c0_73 = arith.constant 0 : index
    %125 = vector.load %arg8[%c0_72, %c0_73] : memref<1x32xf32, #tpu.memory_space<vmem>>, vector<1x32xf32>
    %126 = vector.broadcast %125 : vector<1x32xf32> to vector<8x32xf32>
    %127 = arith.addf %124, %126 : vector<8x32xf32>
    %c0_74 = arith.constant 0 : index
    %c0_75 = arith.constant 0 : index
    %128 = vector.load %arg9[%c0_74, %c0_75] : memref<8x32xf32, #tpu.memory_space<vmem>>, vector<8x32xf32>
    tpu.vector_store %arg9[%c0_74, %c0_75], %127 {strides = array<i32>} : memref<8x32xf32, #tpu.memory_space<vmem>>, vector<8x32xf32>,
    return
  }
  func.func @transform_0(%arg0: i32) -> (i32, i32) {
    %c0_i32 = arith.constant 0 : i32
    %c0_i32_0 = arith.constant 0 : i32
    return %arg0, %c0_i32 : i32, i32
  }
  func.func @transform_1(%arg0: i32) -> (i32, i32, i32) {
    %c0_i32 = arith.constant 0 : i32
    %c0_i32_0 = arith.constant 0 : i32
    %c0_i32_1 = arith.constant 0 : i32
    %c0_i32_2 = arith.constant 0 : i32
    return %c0_i32, %c0_i32_0, %c0_i32_1 : i32, i32, i32
  }
  func.func @transform_2(%arg0: i32) -> (i32, i32) {
    %c0_i32 = arith.constant 0 : i32
    %c0_i32_0 = arith.constant 0 : i32
    %c0_i32_1 = arith.constant 0 : i32
    return %c0_i32, %c0_i32_0 : i32, i32
  }
  func.func @transform_3(%arg0: i32) -> (i32, i32, i32) {
    %c0_i32 = arith.constant 0 : i32
    %c0_i32_0 = arith.constant 0 : i32
    %c0_i32_1 = arith.constant 0 : i32
    %c0_i32_2 = arith.constant 0 : i32
    return %c0_i32, %c0_i32_0, %c0_i32_1 : i32, i32, i32
  }
  func.func @transform_4(%arg0: i32) -> (i32, i32) {
    %c0_i32 = arith.constant 0 : i32
    %c0_i32_0 = arith.constant 0 : i32
    %c0_i32_1 = arith.constant 0 : i32
    return %c0_i32, %c0_i32_0 : i32, i32
  }
  func.func @transform_5(%arg0: i32) -> (i32, i32) {
    %c0_i32 = arith.constant 0 : i32
    %c0_i32_0 = arith.constant 0 : i32
    %c0_i32_1 = arith.constant 0 : i32
    return %c0_i32, %c0_i32_0 : i32, i32
  }
  func.func @transform_6(%arg0: i32) -> (i32, i32) {
    %c0_i32 = arith.constant 0 : i32
    %c0_i32_0 = arith.constant 0 : i32
    %c0_i32_1 = arith.constant 0 : i32
    return %c0_i32, %c0_i32_0 : i32, i32
  }
  func.func @transform_7(%arg0: i32) -> (i32, i32) {
    %c0_i32 = arith.constant 0 : i32
    %c0_i32_0 = arith.constant 0 : i32
    %c0_i32_1 = arith.constant 0 : i32
    return %c0_i32, %c0_i32_0 : i32, i32
  }
  func.func @transform_8(%arg0: i32) -> (i32, i32) {
    %c0_i32 = arith.constant 0 : i32
    %c0_i32_0 = arith.constant 0 : i32
    return %arg0, %c0_i32 : i32, i32
  }
}

</mosaic_0001>

<llo_original>
// kernel: tpu_custom_call.1
$region0: #{tpu_custom_call.1}
  #allocation0 [shape = 'u32[]', space=smem, size = 0x4, offset = 0x4, fixed_abs, tag = 'smem constant byte address 0x4 - core index']
  #allocation1 [shape = 'u32[144,128]{1,0:T(1,128)}', space=vmem, size = 0x12000, scoped, tag = 'internal scratch']
  #allocation2 [shape = 'bf16[2,8,16]{2,1,0:T(8,128)(2,1)}', space=vmem, size = 0x1000, scoped, tag = 'scratch operand']
  #allocation3 [shape = 'bf16[2,8,16]{2,1,0:T(8,128)(2,1)}', space=vmem, size = 0x1000, scoped, tag = 'scratch operand']
  #allocation4 [shape = 'bf16[2,8,16]{2,1,0:T(8,128)(2,1)}', space=vmem, size = 0x1000, scoped, tag = 'scratch operand']
  #allocation5 [shape = 'f32[8,32]{1,0:T(8,128)}', space=vmem, size = 0x1000, scoped, tag = 'scratch operand']
  %s0 = inlined_call_operand.hbm [shape: f32[16,32], index: 0, kind: input, shape index: {}]
  %s1 = inlined_call_operand.hbm [shape: f32[1,8,8], index: 1, kind: input, shape index: {}]
  %s2 = inlined_call_operand.hbm [shape: bf16[32,96], index: 2, kind: input, shape index: {}]
  %s3 = inlined_call_operand.hbm [shape: bf16[2,16,32], index: 3, kind: input, shape index: {}]
  %s4 = inlined_call_operand.vmem [shape: f32[1,96], index: 4, kind: input, shape index: {}]
  %s5 = inlined_call_operand.vmem [shape: f32[1,32], index: 5, kind: input, shape index: {}]
  %s6 = inlined_call_operand.vmem [shape: f32[1,32], index: 6, kind: input, shape index: {}]
  %s7 = inlined_call_operand.vmem [shape: f32[1,32], index: 7, kind: input, shape index: {}]
  %s8 = inlined_call_operand.hbm [shape: f32[16,32], index: 8, kind: output, shape index: {}]
  %s9 = sld [smem:[#allocation0]]
  $region81: #{tpu_custom_call.1} parent=0
    _
  %s11 = ssub.s32 1, %s9
  %s12 = scalar_select 0, %s11, %s9
  $region1: #{tpu_custom_call.1} parent=0
    #allocation6 [shape = 'u8[8192]{0}', space=vmem, size = 0x2000, scoped, tag = 'input window, operand 0']
    #allocation7 [shape = 's32[2]{0}', space=sflag, size = 0x8, scoped, tag = 'scoped memory for tpu_custom_call.1']
    #allocation8 [shape = 's32[2]{0}', space=sflag, size = 0x8, scoped, tag = 'scoped memory for tpu_custom_call.1']
    #allocation9 [shape = 'u8[4096]{0}', space=vmem, size = 0x1000, scoped, tag = 'input window, operand 1, single buffered']
    #allocation10 [shape = 's32[1]{0}', space=sflag, size = 0x4, scoped, tag = 'scoped memory for tpu_custom_call.1']
    #allocation11 [shape = 'u8[8192]{0}', space=vmem, size = 0x2000, scoped, tag = 'input window, operand 2, single buffered']
    #allocation12 [shape = 'u8[8192]{0}', space=vmem, size = 0x2000, scoped, tag = 'input window, operand 3, single buffered']
    #allocation13 [shape = 's32[1]{0}', space=sflag, size = 0x4, scoped, tag = 'scoped memory for tpu_custom_call.1']
    #allocation14 [shape = 'u8[8192]{0}', space=vmem, size = 0x2000, scoped, tag = 'output window, operand 0']
    %13 = vsyncpa [#allocation7], 0
    %s14 = scalar_lea.sflag [#allocation7], 1
    %15 = vsyncpa %s14, 0
    %16 = vsyncpa [#allocation10], 0
    %17 = vsyncpa [#allocation13], 0
    %18 = vsyncpa [#allocation8], 0
    %s19 = scalar_lea.sflag [#allocation8], 1
    %20 = vsyncpa %s19, 0
    loop: start=0, step=1, limit=4
    $region2: #{tpu_custom_call.1} parent=1 // loop_pre_header
      _
    $region3: #{tpu_custom_call.1} parent=1 // loop_header
      %s22 = sphi 0, %s26
      %p23 = scmp.ge.s32.totalorder %s22, 4
      %s32 = sphi 0, %s34
      %s35 = sphi 0, %s32
      %s36 = sphi 0, %s35
      %s52 = sphi 0, %s36
      %s56 = sphi 0, %s56
      %s58 = sphi 0, %s56
      %s59 = sphi 0, %s58
      %s73 = sphi 0, %s59
      %s77 = sphi 0, %s77
      %s79 = sphi 0, %s77
      %s80 = sphi 0, %s79
      %s94 = sphi 0, %s80
      %s98 = sphi 0, %s98
      %s100 = sphi 0, %s98
      %s101 = sphi 0, %s100
      %s115 = sphi 0, %s101
      %s119 = sphi 0, %s119
      %s121 = sphi 0, %s119
      %s122 = sphi 0, %s121
      %s136 = sphi 0, %s122
      %s140 = sphi 0, %s140
      %s142 = sphi 0, %s140
      %s143 = sphi 0, %s142
      %s157 = sphi 0, %s143
      %s161 = sphi 0, %s161
      %s163 = sphi 0, %s161
      %s164 = sphi 0, %s163
      %s178 = sphi 0, %s164
      %s182 = sphi 0, %s182
      %s184 = sphi 0, %s182
      %s185 = sphi 0, %s184
      %s199 = sphi 0, %s185
      %s205 = sphi 0, %s207
      %s208 = sphi 0, %s205
      %s209 = sphi 0, %s208
      %s225 = sphi 0, %s209
    $region4: #{tpu_custom_call.1} parent=1 // loop_header_branch
      %25 = sbr.rel (%p23) target = $region8
    $region5: #{tpu_custom_call.1} parent=1 // loop_body
      %s27 = ssub.s32 %s22, 1
      %s28 = ssub.s32 %s22, 2
      %s29 = sadd.s32 %s22, 1
      %s30 = ssub.s32 %s22, %s29
      %p31 = scmp.eq.s32.totalorder %s30, 0
      %s33 = sadd.s32 %s32, 1
      %s34 = scalar_select %p31, %s32, %s33
      %p37 = pneg %p31
      %p38 = scmp.eq.s32.totalorder %s22, 1
      %p39 = por %p37, %p38
      %p40 = scmp.ne.s32.totalorder %s32, %s35
      %p41 = scmp.eq.s32.totalorder %s22, 0
      %p42 = por %p40, %p41
      %p43 = scmp.ne.s32.totalorder %s32, %s35
      %p44 = scmp.eq.s32.totalorder %s27, 1
      %p45 = por %p43, %p44
      %p46 = scmp.ne.s32.totalorder %s35, %s36
      %p47 = scmp.eq.s32.totalorder %s27, 0
      %p48 = por %p46, %p47
      %p49 = scmp.ne.s32.totalorder %s35, %s36
      %p50 = scmp.eq.s32.totalorder %s28, 1
      %p51 = por %p49, %p50
      %p53 = scmp.ne.s32.totalorder %s36, %s52
      %p54 = scmp.eq.s32.totalorder %s28, 0
      %p55 = por %p53, %p54
      %s57 = sadd.s32 %s56, 1
      %p60 = scmp.eq.s32.totalorder %s22, 1
      %p61 = scmp.ne.s32.totalorder %s56, %s58
      %p62 = scmp.eq.s32.totalorder %s22, 0
      %p63 = por %p61, %p62
      %p64 = scmp.ne.s32.totalorder %s56, %s58
      %p65 = scmp.eq.s32.totalorder %s27, 1
      %p66 = por %p64, %p65
      %p67 = scmp.ne.s32.totalorder %s58, %s59
      %p68 = scmp.eq.s32.totalorder %s27, 0
      %p69 = por %p67, %p68
      %p70 = scmp.ne.s32.totalorder %s58, %s59
      %p71 = scmp.eq.s32.totalorder %s28, 1
      %p72 = por %p70, %p71
      %p74 = scmp.ne.s32.totalorder %s59, %s73
      %p75 = scmp.eq.s32.totalorder %s28, 0
      %p76 = por %p74, %p75
      %s78 = sadd.s32 %s77, 1
      %p81 = scmp.eq.s32.totalorder %s22, 1
      %p82 = scmp.ne.s32.totalorder %s77, %s79
      %p83 = scmp.eq.s32.totalorder %s22, 0
      %p84 = por %p82, %p83
      %p85 = scmp.ne.s32.totalorder %s77, %s79
      %p86 = scmp.eq.s32.totalorder %s27, 1
      %p87 = por %p85, %p86
      %p88 = scmp.ne.s32.totalorder %s79, %s80
      %p89 = scmp.eq.s32.totalorder %s27, 0
      %p90 = por %p88, %p89
      %p91 = scmp.ne.s32.totalorder %s79, %s80
      %p92 = scmp.eq.s32.totalorder %s28, 1
      %p93 = por %p91, %p92
      %p95 = scmp.ne.s32.totalorder %s80, %s94
      %p96 = scmp.eq.s32.totalorder %s28, 0
      %p97 = por %p95, %p96
      %s99 = sadd.s32 %s98, 1
      %p102 = scmp.eq.s32.totalorder %s22, 1
      %p103 = scmp.ne.s32.totalorder %s98, %s100
      %p104 = scmp.eq.s32.totalorder %s22, 0
      %p105 = por %p103, %p104
      %p106 = scmp.ne.s32.totalorder %s98, %s100
      %p107 = scmp.eq.s32.totalorder %s27, 1
      %p108 = por %p106, %p107
      %p109 = scmp.ne.s32.totalorder %s100, %s101
      %p110 = scmp.eq.s32.totalorder %s27, 0
      %p111 = por %p109, %p110
      %p112 = scmp.ne.s32.totalorder %s100, %s101
      %p113 = scmp.eq.s32.totalorder %s28, 1
      %p114 = por %p112, %p113
      %p116 = scmp.ne.s32.totalorder %s101, %s115
      %p117 = scmp.eq.s32.totalorder %s28, 0
      %p118 = por %p116, %p117
      %s120 = sadd.s32 %s119, 1
      %p123 = scmp.eq.s32.totalorder %s22, 1
      %p124 = scmp.ne.s32.totalorder %s119, %s121
      %p125 = scmp.eq.s32.totalorder %s22, 0
      %p126 = por %p124, %p125
      %p127 = scmp.ne.s32.totalorder %s119, %s121
      %p128 = scmp.eq.s32.totalorder %s27, 1
      %p129 = por %p127, %p128
      %p130 = scmp.ne.s32.totalorder %s121, %s122
      %p131 = scmp.eq.s32.totalorder %s27, 0
      %p132 = por %p130, %p131
      %p133 = scmp.ne.s32.totalorder %s121, %s122
      %p134 = scmp.eq.s32.totalorder %s28, 1
      %p135 = por %p133, %p134
      %p137 = scmp.ne.s32.totalorder %s122, %s136
      %p138 = scmp.eq.s32.totalorder %s28, 0
      %p139 = por %p137, %p138
      %s141 = sadd.s32 %s140, 1
      %p144 = scmp.eq.s32.totalorder %s22, 1
      %p145 = scmp.ne.s32.totalorder %s140, %s142
      %p146 = scmp.eq.s32.totalorder %s22, 0
      %p147 = por %p145, %p146
      %p148 = scmp.ne.s32.totalorder %s140, %s142
      %p149 = scmp.eq.s32.totalorder %s27, 1
      %p150 = por %p148, %p149
      %p151 = scmp.ne.s32.totalorder %s142, %s143
      %p152 = scmp.eq.s32.totalorder %s27, 0
      %p153 = por %p151, %p152
      %p154 = scmp.ne.s32.totalorder %s142, %s143
      %p155 = scmp.eq.s32.totalorder %s28, 1
      %p156 = por %p154, %p155
      %p158 = scmp.ne.s32.totalorder %s143, %s157
      %p159 = scmp.eq.s32.totalorder %s28, 0
      %p160 = por %p158, %p159
      %s162 = sadd.s32 %s161, 1
      %p165 = scmp.eq.s32.totalorder %s22, 1
      %p166 = scmp.ne.s32.totalorder %s161, %s163
      %p167 = scmp.eq.s32.totalorder %s22, 0
      %p168 = por %p166, %p167
      %p169 = scmp.ne.s32.totalorder %s161, %s163
      %p170 = scmp.eq.s32.totalorder %s27, 1
      %p171 = por %p169, %p170
      %p172 = scmp.ne.s32.totalorder %s163, %s164
      %p173 = scmp.eq.s32.totalorder %s27, 0
      %p174 = por %p172, %p173
      %p175 = scmp.ne.s32.totalorder %s163, %s164
      %p176 = scmp.eq.s32.totalorder %s28, 1
      %p177 = por %p175, %p176
      %p179 = scmp.ne.s32.totalorder %s164, %s178
      %p180 = scmp.eq.s32.totalorder %s28, 0
      %p181 = por %p179, %p180
      %s183 = sadd.s32 %s182, 1
      %p186 = scmp.eq.s32.totalorder %s22, 1
      %p187 = scmp.ne.s32.totalorder %s182, %s184
      %p188 = scmp.eq.s32.totalorder %s22, 0
      %p189 = por %p187, %p188
      %p190 = scmp.ne.s32.totalorder %s182, %s184
      %p191 = scmp.eq.s32.totalorder %s27, 1
      %p192 = por %p190, %p191
      %p193 = scmp.ne.s32.totalorder %s184, %s185
      %p194 = scmp.eq.s32.totalorder %s27, 0
      %p195 = por %p193, %p194
      %p196 = scmp.ne.s32.totalorder %s184, %s185
      %p197 = scmp.eq.s32.totalorder %s28, 1
      %p198 = por %p196, %p197
      %p200 = scmp.ne.s32.totalorder %s185, %s199
      %p201 = scmp.eq.s32.totalorder %s28, 0
      %p202 = por %p200, %p201
      %s203 = ssub.s32 %s22, %s29
      %p204 = scmp.eq.s32.totalorder %s203, 0
      %s206 = sadd.s32 %s205, 1
      %s207 = scalar_select %p204, %s205, %s206
      %p210 = pneg %p204
      %p211 = scmp.eq.s32.totalorder %s22, 1
      %p212 = por %p210, %p211
      %p213 = scmp.ne.s32.totalorder %s205, %s208
      %p214 = scmp.eq.s32.totalorder %s22, 0
      %p215 = por %p213, %p214
      %p216 = scmp.ne.s32.totalorder %s205, %s208
      %p217 = scmp.eq.s32.totalorder %s27, 1
      %p218 = por %p216, %p217
      %p219 = scmp.ne.s32.totalorder %s208, %s209
      %p220 = scmp.eq.s32.totalorder %s27, 0
      %p221 = por %p219, %p220
      %p222 = scmp.ne.s32.totalorder %s208, %s209
      %p223 = scmp.eq.s32.totalorder %s28, 1
      %p224 = por %p222, %p223
      %p226 = scmp.ne.s32.totalorder %s209, %s225
      %p227 = scmp.eq.s32.totalorder %s28, 0
      %p228 = por %p226, %p227
      %p229 = scmp.le.s32.totalorder 1, %s22
      %p230 = scmp.lt.s32.totalorder %s22, 3
      %p231 = pnand %p229, %p230
      %p232 = pneg %p231
      // Predicated region
      $region9: #{tpu_custom_call.1} parent=5 // pred_check
        _
      $region10: #{tpu_custom_call.1} parent=5 // pred_check_branch
        %234 = sbr.rel (%p231) target = $region12
      $region11: #{tpu_custom_call.1} parent=5 // pred_region
        %s235 = ssub.s32 %s22, 1
        // Predicated region
        $region13: #{tpu_custom_call.1} parent=11 // pred_check
          %p236 = pneg %p69
        $region14: #{tpu_custom_call.1} parent=11 // pred_check_branch
          %238 = sbr.rel (%p236) target = $region16
        $region15: #{tpu_custom_call.1} parent=11 // pred_region
          %s240 = ssub.s32 128, 128
          %241 = vsyncadd [#allocation10], %s240
          %s243 = sshll.u32 [#allocation9], 4
          %s244 = int_to_ptr.vmem [resolvable:$true] %s243
          %246 = dma.hbm_to_vmem [thread:$0]  %s1, 128, %s244, [#allocation10]
        $region16: #{tpu_custom_call.1} parent=11 // pred_fallthru
          _
        // Predicated region
        $region17: #{tpu_custom_call.1} parent=11 // pred_check
          %p247 = pneg %p90
        $region18: #{tpu_custom_call.1} parent=11 // pred_check_branch
          %249 = sbr.rel (%p247) target = $region20
        $region19: #{tpu_custom_call.1} parent=11 // pred_region
          %s251 = ssub.s32 256, 256
          %252 = vsyncadd [#allocation10], %s251
          %s253 = sshll.u32 [#allocation11], 4
          %s254 = int_to_ptr.vmem [resolvable:$true] %s253
          %259 = dma.hbm_to_vmem [thread:$0]  %s2, 256, %s254, [#allocation10], 64, 64, 4
        $region20: #{tpu_custom_call.1} parent=11 // pred_fallthru
          _
        // Predicated region
        $region21: #{tpu_custom_call.1} parent=11 // pred_check
          %p260 = pneg %p111
        $region22: #{tpu_custom_call.1} parent=11 // pred_check_branch
          %262 = sbr.rel (%p260) target = $region24
        $region23: #{tpu_custom_call.1} parent=11 // pred_region
          %s264 = ssub.s32 256, 256
          %265 = vsyncadd [#allocation13], %s264
          %s266 = sshll.u32 [#allocation12], 4
          %s267 = int_to_ptr.vmem [resolvable:$true] %s266
          %272 = dma.hbm_to_vmem [thread:$0]  %s3, 256, %s267, [#allocation13], 64, 64, 4
        $region24: #{tpu_custom_call.1} parent=11 // pred_fallthru
          _
        // Predicated region
        $region25: #{tpu_custom_call.1} parent=11 // pred_check
          %p273 = pneg %p132
        $region26: #{tpu_custom_call.1} parent=11 // pred_check_branch
          %275 = sbr.rel (%p273) target = $region28
        $region27: #{tpu_custom_call.1} parent=11 // pred_region
          _
        $region28: #{tpu_custom_call.1} parent=11 // pred_fallthru
          _
        // Predicated region
        $region29: #{tpu_custom_call.1} parent=11 // pred_check
          %p276 = pneg %p153
        $region30: #{tpu_custom_call.1} parent=11 // pred_check_branch
          %278 = sbr.rel (%p276) target = $region32
        $region31: #{tpu_custom_call.1} parent=11 // pred_region
          _
        $region32: #{tpu_custom_call.1} parent=11 // pred_fallthru
          _
        // Predicated region
        $region33: #{tpu_custom_call.1} parent=11 // pred_check
          %p279 = pneg %p174
        $region34: #{tpu_custom_call.1} parent=11 // pred_check_branch
          %281 = sbr.rel (%p279) target = $region36
        $region35: #{tpu_custom_call.1} parent=11 // pred_region
          _
        $region36: #{tpu_custom_call.1} parent=11 // pred_fallthru
          _
        // Predicated region
        $region37: #{tpu_custom_call.1} parent=11 // pred_check
          %p282 = pneg %p195
        $region38: #{tpu_custom_call.1} parent=11 // pred_check_branch
          %284 = sbr.rel (%p282) target = $region40
        $region39: #{tpu_custom_call.1} parent=11 // pred_region
          _
        $region40: #{tpu_custom_call.1} parent=11 // pred_fallthru
          _
      $region12: #{tpu_custom_call.1} parent=5 // pred_fallthru
        _
      %p285 = scmp.lt.s32.totalorder %s22, 2
      // Predicated region
      $region41: #{tpu_custom_call.1} parent=5 // pred_check
        %p286 = pneg %p285
      $region42: #{tpu_custom_call.1} parent=5 // pred_check_branch
        %288 = sbr.rel (%p286) target = $region44
      $region43: #{tpu_custom_call.1} parent=5 // pred_region
        // Predicated region
        $region45: #{tpu_custom_call.1} parent=43 // pred_check
          %p289 = pneg %p42
        $region46: #{tpu_custom_call.1} parent=43 // pred_check_branch
          %291 = sbr.rel (%p289) target = $region48
        $region47: #{tpu_custom_call.1} parent=43 // pred_region
          %s292 = sand.u32 %s32, 1
          %s293 = scalar_lea.sflag [#allocation7], %s292
          %s294 = sand.u32 %s32, 1
          %s295 = smul.addr %s294, 8
          %s296 = scalar_lea.vmem [#allocation6], %s295
          %s298 = ssub.s32 128, 128
          %299 = vsyncadd %s293, %s298
          %s300 = smul.addr %s22, 128
          %s301 = scalar_lea.hbm %s0, %s300
          %s303 = sshll.u32 %s296, 4
          %s304 = int_to_ptr.vmem [resolvable:$true] %s303
          %306 = dma.hbm_to_vmem [thread:$0]  %s301, 128, %s304, %s293
        $region48: #{tpu_custom_call.1} parent=43 // pred_fallthru
          _
      $region44: #{tpu_custom_call.1} parent=5 // pred_fallthru
        _
      %p307 = scmp.le.s32.totalorder 1, %s22
      %p308 = scmp.lt.s32.totalorder %s22, 3
      %p309 = pnand %p307, %p308
      %p310 = pneg %p309
      // Predicated region
      $region49: #{tpu_custom_call.1} parent=5 // pred_check
        _
      $region50: #{tpu_custom_call.1} parent=5 // pred_check_branch
        %312 = sbr.rel (%p309) target = $region52
      $region51: #{tpu_custom_call.1} parent=5 // pred_region
        %s313 = ssub.s32 %s22, 1
        %s314 = sand.u32 %s35, 1
        %s315 = scalar_lea.sflag [#allocation7], %s314
        %s316 = sand.u32 %s35, 1
        %s317 = smul.addr %s316, 8
        %s318 = scalar_lea.vmem [#allocation6], %s317
        // Predicated region
        $region53: #{tpu_custom_call.1} parent=51 // pred_check
          %p319 = pneg %p48
        $region54: #{tpu_custom_call.1} parent=51 // pred_check_branch
          %321 = sbr.rel (%p319) target = $region56
        $region55: #{tpu_custom_call.1} parent=51 // pred_region
          %322 = dma.done %s315, 128
        $region56: #{tpu_custom_call.1} parent=51 // pred_fallthru
          _
        // Predicated region
        $region57: #{tpu_custom_call.1} parent=51 // pred_check
          %p323 = pneg %p69
        $region58: #{tpu_custom_call.1} parent=51 // pred_check_branch
          %325 = sbr.rel (%p323) target = $region60
        $region59: #{tpu_custom_call.1} parent=51 // pred_region
          %326 = dma.done [#allocation10], 128
        $region60: #{tpu_custom_call.1} parent=51 // pred_fallthru
          _
        // Predicated region
        $region61: #{tpu_custom_call.1} parent=51 // pred_check
          %p327 = pneg %p90
        $region62: #{tpu_custom_call.1} parent=51 // pred_check_branch
          %329 = sbr.rel (%p327) target = $region64
        $region63: #{tpu_custom_call.1} parent=51 // pred_region
          %330 = dma.done [#allocation10], 256
        $region64: #{tpu_custom_call.1} parent=51 // pred_fallthru
          _
        // Predicated region
        $region65: #{tpu_custom_call.1} parent=51 // pred_check
          %p331 = pneg %p111
        $region66: #{tpu_custom_call.1} parent=51 // pred_check_branch
          %333 = sbr.rel (%p331) target = $region68
        $region67: #{tpu_custom_call.1} parent=51 // pred_region
          %334 = dma.done [#allocation13], 256
        $region68: #{tpu_custom_call.1} parent=51 // pred_fallthru
          _
        %s335 = sand.u32 %s35, 1
        %s336 = scalar_lea.sflag [#allocation7], %s335
        %s337 = sand.u32 %s35, 1
        %s338 = smul.addr %s337, 8
        %s339 = scalar_lea.vmem [#allocation6], %s338
        %p340 = pneg %p48
        %p341 = pneg %p45
        %p342 = pneg %p69
        %p343 = pneg %p66
        %p344 = pneg %p90
        %p345 = pneg %p87
        %p346 = pneg %p111
        %p347 = pneg %p108
        %p348 = pneg %p132
        %p349 = pneg %p129
        %p350 = pneg %p153
        %p351 = pneg %p150
        %p352 = pneg %p174
        %p353 = pneg %p171
        %p354 = pneg %p195
        %p355 = pneg %p192
        %p356 = pneg %p221
        %p357 = pneg %p218
        %s358 = sand.u32 %s208, 1
        %s359 = scalar_lea.sflag [#allocation8], %s358
        %s360 = sand.u32 %s208, 1
        %s361 = smul.addr %s360, 8
        %s362 = scalar_lea.vmem [#allocation14], %s361
        %v364 = vld [vmem:[%s318] sm:$0xff]
        %v365 = vpack.c.bf16 %v364, %v364
        %v366 = vld [vmem:[#allocation11] sm:$0xf]
        %v367 = vld [vmem:[#allocation11 + $0x4] sm:$0xf]
        %v368 = vld [vmem:[#allocation11 + $0x8] sm:$0xf]
        %v369 = vld [vmem:[#allocation11 + $0xc] sm:$0xf]
        %v370 = vld [vmem:[%s4] sm:$0x1]
        %v372 = vlaneseq
        %v373 = vshrl.u32 %v372, 7
        %v374 = vsub.s32 0, %v373
        %v375 = vrot.slane %v370, %v374
        %v381 = vunpack.c.l.b16 %v366
        %v382 = vunpack.c.l.b16 %v367
        %v383 = vunpack.c.l.b16 %v368
        %v384 = vunpack.c.l.b16 %v369
        %v385 = vpack.c.b16 %v382, %v381
        %v386 = vpack.c.b16 %v384, %v383
        %vm389 = vcmask 261120
        %v391 = vsel %vm389, %v365, 0
        %393 = vmatprep.subr.bf16.mxu0 0
        %394 = vmatpush1.bf16.msra.mxu0 %v385
        %395 = vmatprep.subr.bf16.mxu0 0
        %396 = vmatpush1.bf16.msra.mxu0 %v386
        %397 = vmatprep.subr.bf16.mxu0 0
        %398 = vmatpush1.bf16.msra.mxu0 0
        %399 = vmatprep.subr.bf16.mxu0 0
        %400 = vmatpush1.bf16.msra.mxu0 0
        %401 = vmatprep.subr.bf16.mxu0 0
        %402 = vmatpush1.bf16.msra.mxu0 0
        %403 = vmatprep.subr.bf16.mxu0 0
        %404 = vmatpush1.bf16.msra.mxu0 0
        %405 = vmatprep.subr.bf16.mxu0 0
        %406 = vmatpush1.bf16.msra.mxu0 0
        %407 = vmatprep.subr.bf16.mxu0 0
        %408 = vmatpush1.bf16.msra.mxu0 0
        %409 = vmatprep.subr.bf16.mxu0 0
        %410 = vmatpush1.bf16.msra.mxu0 0
        %411 = vmatprep.subr.bf16.mxu0 0
        %412 = vmatpush1.bf16.msra.mxu0 0
        %413 = vmatprep.subr.bf16.mxu0 0
        %414 = vmatpush1.bf16.msra.mxu0 0
        %415 = vmatprep.subr.bf16.mxu0 0
        %416 = vmatpush1.bf16.msra.mxu0 0
        %417 = vmatprep.subr.bf16.mxu0 0
        %418 = vmatpush1.bf16.msra.mxu0 0
        %419 = vmatprep.subr.bf16.mxu0 0
        %420 = vmatpush1.bf16.msra.mxu0 0
        %421 = vmatprep.subr.bf16.mxu0 0
        %422 = vmatpush1.bf16.msra.mxu0 0
        %423 = vmatprep.subr.bf16.mxu0 0
        %424 = vmatpush1.bf16.msra.mxu0 0
        %425 = vmatprep.mubr.bf16.mxu0 0
        %426 = vmatmul.mubr.bf16.gmra.mrb[0].mxu0 %v391
        %v427 = vpop.f32.mrb[0].mxu0
        %v428 = vadd.f32 %v375, %v427
        %v429 = vpop.f32.mrb[0].mxu0
        %v430 = vpop.f32.mrb[0].mxu0
        %v431 = vpop.f32.mrb[0].mxu0
        %432 = vdwg.mxu0
        %v433 = vpack.c.bf16 %v428, %v428
        %vm434 = vcmask 125952
        %435 = vst.msk [vmem:[#allocation2] sm:$0xf] %vm434, %v433
        %v437 = vunpack.c.l.b16 %v433
        %v438 = vpack.c.b16 %v437, %v437
        %439 = vrot.lane.b32.xlu0 %v438, 96
        %v440 = vpop.permute.xlu0 %439
        %442 = vst.msk [vmem:[#allocation3] sm:$0xf] %vm434, %v440
        %443 = vrot.lane.b32.xlu0 %v438, 64
        %v444 = vpop.permute.xlu0 %443
        %446 = vst.msk [vmem:[#allocation4] sm:$0xf] %vm434, %v444
        %447 = vrot.lane.b32.xlu0 %v438, 112
        %v448 = vpop.permute.xlu0 %447
        %s450 = scalar_lea.vmem [#allocation2], 4
        %451 = vst.msk [vmem:[%s450] sm:$0xf] %vm434, %v448
        %452 = vrot.lane.b32.xlu0 %v438, 80
        %v453 = vpop.permute.xlu0 %452
        %s455 = scalar_lea.vmem [#allocation3], 4
        %456 = vst.msk [vmem:[%s455] sm:$0xf] %vm434, %v453
        %457 = vrot.lane.b32.xlu0 %v438, 48
        %v458 = vpop.permute.xlu0 %457
        %s460 = scalar_lea.vmem [#allocation4], 4
        %461 = vst.msk [vmem:[%s460] sm:$0xf] %vm434, %v458
        %v462 = vld [vmem:[%s5] sm:$0x1]
        %v464 = vlaneseq
        %v465 = vshrl.u32 %v464, 7
        %v466 = vsub.s32 0, %v465
        %v467 = vrot.slane %v462, %v466
        %v469 = vadd.f32 %v364, %v467
        %470 = vst.msk [vmem:[#allocation5] sm:$0xff] %vm389, %v469
        %v471 = vld [vmem:[#allocation9] sm:$0xff]
        %v472 = vld [vmem:[#allocation2] sm:$0xf]
        %v473 = vld [vmem:[#allocation3] sm:$0xf]
        %v474 = vld [vmem:[#allocation4] sm:$0xf]
        %vm475 = vcmask 130048
        %v477 = vsel %vm475, %v472, 0
        %v480 = vsel %vm475, %v473, 0
        %482 = vmatprep.subr.bf16.mxu0 0
        %483 = vmatpush1.bf16.xpose.msra.mxu0 %v480
        %484 = vmatprep.subr.bf16.mxu0 0
        %485 = vmatpush1.bf16.xpose.msra.mxu0 0
        %486 = vmatprep.subr.bf16.mxu0 0
        %487 = vmatpush1.bf16.xpose.msra.mxu0 0
        %488 = vmatprep.subr.bf16.mxu0 0
        %489 = vmatpush1.bf16.xpose.msra.mxu0 0
        %490 = vmatprep.subr.bf16.mxu0 0
        %491 = vmatpush1.bf16.xpose.msra.mxu0 0
        %492 = vmatprep.subr.bf16.mxu0 0
        %493 = vmatpush1.bf16.xpose.msra.mxu0 0
        %494 = vmatprep.subr.bf16.mxu0 0
        %495 = vmatpush1.bf16.xpose.msra.mxu0 0
        %496 = vmatprep.subr.bf16.mxu0 0
        %497 = vmatpush1.bf16.xpose.msra.mxu0 0
        %498 = vmatprep.subr.bf16.mxu0 0
        %499 = vmatpush1.bf16.xpose.msra.mxu0 0
        %500 = vmatprep.subr.bf16.mxu0 0
        %501 = vmatpush1.bf16.xpose.msra.mxu0 0
        %502 = vmatprep.subr.bf16.mxu0 0
        %503 = vmatpush1.bf16.xpose.msra.mxu0 0
        %504 = vmatprep.subr.bf16.mxu0 0
        %505 = vmatpush1.bf16.xpose.msra.mxu0 0
        %506 = vmatprep.subr.bf16.mxu0 0
        %507 = vmatpush1.bf16.xpose.msra.mxu0 0
        %508 = vmatprep.subr.bf16.mxu0 0
        %509 = vmatpush1.bf16.xpose.msra.mxu0 0
        %510 = vmatprep.subr.bf16.mxu0 0
        %511 = vmatpush1.bf16.xpose.msra.mxu0 0
        %512 = vmatprep.subr.bf16.mxu0 0
        %513 = vmatpush1.bf16.xpose.msra.mxu0 0
        %514 = vmatprep.mubr.bf16.mxu0 0
        %515 = vmatmul.mubr.bf16.gmra.mrb[0].mxu0 %v477
        %v516 = vpop.f32.mrb[0].mxu0
        %v517 = vadd.f32 %v471, %v516
        %v518 = vpop.f32.mrb[0].mxu0
        %v519 = vpop.f32.mrb[0].mxu0
        %v520 = vpop.f32.mrb[0].mxu0
        %521 = vdwg.mxu0
        %vm522 = vcmask 64512
        %v523 = vsel %vm522, %v517, -inf
        %524 = vmax.xlane.f32.xlu0 %v523
        %v525 = vpop.xlane.xlu0 %524
        %v526 = vsub.f32 %v517, %v525
        %v527 = vmul.f32 %v526, 1.442695
        %v528 = vpow.pop %v527
        %v529 = vsel %vm522, %v528, 0.0
        %530 = vadd.xlane.f32.xlu0 %v529
        %v531 = vpop.xlane.xlu0 %530
        %v532 = vrcp.pop %v531
        %v533 = vmul.f32 %v528, %v532
        %v534 = vpack.c.bf16 %v533, %v533
        %v536 = vsel %vm522, %v534, 0
        %vm538 = vcmask 1043456
        %v540 = vsel %vm538, %v474, 0
        %542 = vmatprep.subr.bf16.mxu0 0
        %543 = vmatpush1.bf16.msra.mxu0 %v540
        %544 = vmatprep.subr.bf16.mxu0 0
        %545 = vmatpush1.bf16.msra.mxu0 0
        %546 = vmatprep.subr.bf16.mxu0 0
        %547 = vmatpush1.bf16.msra.mxu0 0
        %548 = vmatprep.subr.bf16.mxu0 0
        %549 = vmatpush1.bf16.msra.mxu0 0
        %550 = vmatprep.subr.bf16.mxu0 0
        %551 = vmatpush1.bf16.msra.mxu0 0
        %552 = vmatprep.subr.bf16.mxu0 0
        %553 = vmatpush1.bf16.msra.mxu0 0
        %554 = vmatprep.subr.bf16.mxu0 0
        %555 = vmatpush1.bf16.msra.mxu0 0
        %556 = vmatprep.subr.bf16.mxu0 0
        %557 = vmatpush1.bf16.msra.mxu0 0
        %558 = vmatprep.subr.bf16.mxu0 0
        %559 = vmatpush1.bf16.msra.mxu0 0
        %560 = vmatprep.subr.bf16.mxu0 0
        %561 = vmatpush1.bf16.msra.mxu0 0
        %562 = vmatprep.subr.bf16.mxu0 0
        %563 = vmatpush1.bf16.msra.mxu0 0
        %564 = vmatprep.subr.bf16.mxu0 0
        %565 = vmatpush1.bf16.msra.mxu0 0
        %566 = vmatprep.subr.bf16.mxu0 0
        %567 = vmatpush1.bf16.msra.mxu0 0
        %568 = vmatprep.subr.bf16.mxu0 0
        %569 = vmatpush1.bf16.msra.mxu0 0
        %570 = vmatprep.subr.bf16.mxu0 0
        %571 = vmatpush1.bf16.msra.mxu0 0
        %572 = vmatprep.subr.bf16.mxu0 0
        %573 = vmatpush1.bf16.msra.mxu0 0
        %574 = vmatprep.mubr.bf16.mxu0 0
        %575 = vmatmul.mubr.bf16.gmra.mrb[0].mxu0 %v536
        %v576 = vpop.f32.mrb[0].mxu0
        %v577 = vadd.f32 0.0, %v576
        %v578 = vpop.f32.mrb[0].mxu0
        %v579 = vpop.f32.mrb[0].mxu0
        %v580 = vpop.f32.mrb[0].mxu0
        %581 = vdwg.mxu0
        %v582 = vpack.c.bf16 %v577, %v577
        %v583 = vld [vmem:[#allocation12] sm:$0xf]
        %v584 = vld [vmem:[#allocation12 + $0x4] sm:$0xf]
        %v587 = vunpack.c.l.b16 %v583
        %v588 = vunpack.c.l.b16 %v584
        %v589 = vpack.c.b16 %v588, %v587
        %v592 = vsel %vm475, %v582, 0
        %594 = vmatprep.subr.bf16.mxu0 0
        %595 = vmatpush1.bf16.msra.mxu0 %v589
        %596 = vmatprep.subr.bf16.mxu0 0
        %597 = vmatpush1.bf16.msra.mxu0 0
        %598 = vmatprep.subr.bf16.mxu0 0
        %599 = vmatpush1.bf16.msra.mxu0 0
        %600 = vmatprep.subr.bf16.mxu0 0
        %601 = vmatpush1.bf16.msra.mxu0 0
        %602 = vmatprep.subr.bf16.mxu0 0
        %603 = vmatpush1.bf16.msra.mxu0 0
        %604 = vmatprep.subr.bf16.mxu0 0
        %605 = vmatpush1.bf16.msra.mxu0 0
        %606 = vmatprep.subr.bf16.mxu0 0
        %607 = vmatpush1.bf16.msra.mxu0 0
        %608 = vmatprep.subr.bf16.mxu0 0
        %609 = vmatpush1.bf16.msra.mxu0 0
        %610 = vmatprep.subr.bf16.mxu0 0
        %611 = vmatpush1.bf16.msra.mxu0 0
        %612 = vmatprep.subr.bf16.mxu0 0
        %613 = vmatpush1.bf16.msra.mxu0 0
        %614 = vmatprep.subr.bf16.mxu0 0
        %615 = vmatpush1.bf16.msra.mxu0 0
        %616 = vmatprep.subr.bf16.mxu0 0
        %617 = vmatpush1.bf16.msra.mxu0 0
        %618 = vmatprep.subr.bf16.mxu0 0
        %619 = vmatpush1.bf16.msra.mxu0 0
        %620 = vmatprep.subr.bf16.mxu0 0
        %621 = vmatpush1.bf16.msra.mxu0 0
        %622 = vmatprep.subr.bf16.mxu0 0
        %623 = vmatpush1.bf16.msra.mxu0 0
        %624 = vmatprep.subr.bf16.mxu0 0
        %625 = vmatpush1.bf16.msra.mxu0 0
        %626 = vmatprep.mubr.bf16.mxu0 0
        %627 = vmatmul.mubr.bf16.gmra.mrb[0].mxu0 %v592
        %v628 = vpop.f32.mrb[0].mxu0
        %v629 = vadd.f32 0.0, %v628
        %v630 = vpop.f32.mrb[0].mxu0
        %v631 = vpop.f32.mrb[0].mxu0
        %v632 = vpop.f32.mrb[0].mxu0
        %633 = vdwg.mxu0
        %v634 = vld [vmem:[#allocation5] sm:$0xff]
        %v635 = vadd.f32 %v634, %v629
        %636 = vst.msk [vmem:[#allocation5] sm:$0xff] %vm389, %v635
        %v637 = vld [vmem:[%s450] sm:$0xf]
        %v638 = vld [vmem:[%s455] sm:$0xf]
        %v639 = vld [vmem:[%s460] sm:$0xf]
        %v641 = vsel %vm475, %v637, 0
        %v644 = vsel %vm475, %v638, 0
        %646 = vmatprep.subr.bf16.mxu0 0
        %647 = vmatpush1.bf16.xpose.msra.mxu0 %v644
        %648 = vmatprep.subr.bf16.mxu0 0
        %649 = vmatpush1.bf16.xpose.msra.mxu0 0
        %650 = vmatprep.subr.bf16.mxu0 0
        %651 = vmatpush1.bf16.xpose.msra.mxu0 0
        %652 = vmatprep.subr.bf16.mxu0 0
        %653 = vmatpush1.bf16.xpose.msra.mxu0 0
        %654 = vmatprep.subr.bf16.mxu0 0
        %655 = vmatpush1.bf16.xpose.msra.mxu0 0
        %656 = vmatprep.subr.bf16.mxu0 0
        %657 = vmatpush1.bf16.xpose.msra.mxu0 0
        %658 = vmatprep.subr.bf16.mxu0 0
        %659 = vmatpush1.bf16.xpose.msra.mxu0 0
        %660 = vmatprep.subr.bf16.mxu0 0
        %661 = vmatpush1.bf16.xpose.msra.mxu0 0
        %662 = vmatprep.subr.bf16.mxu0 0
        %663 = vmatpush1.bf16.xpose.msra.mxu0 0
        %664 = vmatprep.subr.bf16.mxu0 0
        %665 = vmatpush1.bf16.xpose.msra.mxu0 0
        %666 = vmatprep.subr.bf16.mxu0 0
        %667 = vmatpush1.bf16.xpose.msra.mxu0 0
        %668 = vmatprep.subr.bf16.mxu0 0
        %669 = vmatpush1.bf16.xpose.msra.mxu0 0
        %670 = vmatprep.subr.bf16.mxu0 0
        %671 = vmatpush1.bf16.xpose.msra.mxu0 0
        %672 = vmatprep.subr.bf16.mxu0 0
        %673 = vmatpush1.bf16.xpose.msra.mxu0 0
        %674 = vmatprep.subr.bf16.mxu0 0
        %675 = vmatpush1.bf16.xpose.msra.mxu0 0
        %676 = vmatprep.subr.bf16.mxu0 0
        %677 = vmatpush1.bf16.xpose.msra.mxu0 0
        %678 = vmatprep.mubr.bf16.mxu0 0
        %679 = vmatmul.mubr.bf16.gmra.mrb[0].mxu0 %v641
        %v680 = vpop.f32.mrb[0].mxu0
        %v681 = vadd.f32 %v471, %v680
        %v682 = vpop.f32.mrb[0].mxu0
        %v683 = vpop.f32.mrb[0].mxu0
        %v684 = vpop.f32.mrb[0].mxu0
        %685 = vdwg.mxu0
        %v686 = vsel %vm522, %v681, -inf
        %687 = vmax.xlane.f32.xlu0 %v686
        %v688 = vpop.xlane.xlu0 %687
        %v689 = vsub.f32 %v681, %v688
        %v690 = vmul.f32 %v689, 1.442695
        %v691 = vpow.pop %v690
        %v692 = vsel %vm522, %v691, 0.0
        %693 = vadd.xlane.f32.xlu0 %v692
        %v694 = vpop.xlane.xlu0 %693
        %v695 = vrcp.pop %v694
        %v696 = vmul.f32 %v691, %v695
        %v697 = vpack.c.bf16 %v696, %v696
        %v699 = vsel %vm522, %v697, 0
        %v702 = vsel %vm538, %v639, 0
        %704 = vmatprep.subr.bf16.mxu0 0
        %705 = vmatpush1.bf16.msra.mxu0 %v702
        %706 = vmatprep.subr.bf16.mxu0 0
        %707 = vmatpush1.bf16.msra.mxu0 0
        %708 = vmatprep.subr.bf16.mxu0 0
        %709 = vmatpush1.bf16.msra.mxu0 0
        %710 = vmatprep.subr.bf16.mxu0 0
        %711 = vmatpush1.bf16.msra.mxu0 0
        %712 = vmatprep.subr.bf16.mxu0 0
        %713 = vmatpush1.bf16.msra.mxu0 0
        %714 = vmatprep.subr.bf16.mxu0 0
        %715 = vmatpush1.bf16.msra.mxu0 0
        %716 = vmatprep.subr.bf16.mxu0 0
        %717 = vmatpush1.bf16.msra.mxu0 0
        %718 = vmatprep.subr.bf16.mxu0 0
        %719 = vmatpush1.bf16.msra.mxu0 0
        %720 = vmatprep.subr.bf16.mxu0 0
        %721 = vmatpush1.bf16.msra.mxu0 0
        %722 = vmatprep.subr.bf16.mxu0 0
        %723 = vmatpush1.bf16.msra.mxu0 0
        %724 = vmatprep.subr.bf16.mxu0 0
        %725 = vmatpush1.bf16.msra.mxu0 0
        %726 = vmatprep.subr.bf16.mxu0 0
        %727 = vmatpush1.bf16.msra.mxu0 0
        %728 = vmatprep.subr.bf16.mxu0 0
        %729 = vmatpush1.bf16.msra.mxu0 0
        %730 = vmatprep.subr.bf16.mxu0 0
        %731 = vmatpush1.bf16.msra.mxu0 0
        %732 = vmatprep.subr.bf16.mxu0 0
        %733 = vmatpush1.bf16.msra.mxu0 0
        %734 = vmatprep.subr.bf16.mxu0 0
        %735 = vmatpush1.bf16.msra.mxu0 0
        %736 = vmatprep.mubr.bf16.mxu0 0
        %737 = vmatmul.mubr.bf16.gmra.mrb[0].mxu0 %v699
        %v738 = vpop.f32.mrb[0].mxu0
        %v739 = vadd.f32 0.0, %v738
        %v740 = vpop.f32.mrb[0].mxu0
        %v741 = vpop.f32.mrb[0].mxu0
        %v742 = vpop.f32.mrb[0].mxu0
        %743 = vdwg.mxu0
        %v744 = vpack.c.bf16 %v739, %v739
        %s745 = scalar_lea.vmem [#allocation12], 8
        %v746 = vld [vmem:[%s745] sm:$0xf]
        %v747 = vld [vmem:[%s745 + $0x4] sm:$0xf]
        %v750 = vunpack.c.l.b16 %v746
        %v751 = vunpack.c.l.b16 %v747
        %v752 = vpack.c.b16 %v751, %v750
        %v755 = vsel %vm475, %v744, 0
        %757 = vmatprep.subr.bf16.mxu0 0
        %758 = vmatpush1.bf16.msra.mxu0 %v752
        %759 = vmatprep.subr.bf16.mxu0 0
        %760 = vmatpush1.bf16.msra.mxu0 0
        %761 = vmatprep.subr.bf16.mxu0 0
        %762 = vmatpush1.bf16.msra.mxu0 0
        %763 = vmatprep.subr.bf16.mxu0 0
        %764 = vmatpush1.bf16.msra.mxu0 0
        %765 = vmatprep.subr.bf16.mxu0 0
        %766 = vmatpush1.bf16.msra.mxu0 0
        %767 = vmatprep.subr.bf16.mxu0 0
        %768 = vmatpush1.bf16.msra.mxu0 0
        %769 = vmatprep.subr.bf16.mxu0 0
        %770 = vmatpush1.bf16.msra.mxu0 0
        %771 = vmatprep.subr.bf16.mxu0 0
        %772 = vmatpush1.bf16.msra.mxu0 0
        %773 = vmatprep.subr.bf16.mxu0 0
        %774 = vmatpush1.bf16.msra.mxu0 0
        %775 = vmatprep.subr.bf16.mxu0 0
        %776 = vmatpush1.bf16.msra.mxu0 0
        %777 = vmatprep.subr.bf16.mxu0 0
        %778 = vmatpush1.bf16.msra.mxu0 0
        %779 = vmatprep.subr.bf16.mxu0 0
        %780 = vmatpush1.bf16.msra.mxu0 0
        %781 = vmatprep.subr.bf16.mxu0 0
        %782 = vmatpush1.bf16.msra.mxu0 0
        %783 = vmatprep.subr.bf16.mxu0 0
        %784 = vmatpush1.bf16.msra.mxu0 0
        %785 = vmatprep.subr.bf16.mxu0 0
        %786 = vmatpush1.bf16.msra.mxu0 0
        %787 = vmatprep.subr.bf16.mxu0 0
        %788 = vmatpush1.bf16.msra.mxu0 0
        %789 = vmatprep.mubr.bf16.mxu0 0
        %790 = vmatmul.mubr.bf16.gmra.mrb[0].mxu0 %v755
        %v791 = vpop.f32.mrb[0].mxu0
        %v792 = vadd.f32 0.0, %v791
        %v793 = vpop.f32.mrb[0].mxu0
        %v794 = vpop.f32.mrb[0].mxu0
        %v795 = vpop.f32.mrb[0].mxu0
        %796 = vdwg.mxu0
        %v797 = vld [vmem:[#allocation5] sm:$0xff]
        %v798 = vadd.f32 %v797, %v792
        %799 = vst.msk [vmem:[#allocation5] sm:$0xff] %vm389, %v798
        %v800 = vld [vmem:[#allocation5] sm:$0xff]
        %v801 = vsel %vm389, %v800, 0.0
        %802 = vadd.xlane.f32.xlu0 %v801
        %v803 = vpop.xlane.xlu0 %802
        %v804 = vrcp.pop 32.0
        %v805 = vmul.f32 %v803, %v804
        %v806 = vsub.f32 %v800, %v805
        %v807 = vmul.f32 %v806, %v806
        %v808 = vsel %vm389, %v807, 0.0
        %809 = vadd.xlane.f32.xlu0 %v808
        %v810 = vpop.xlane.xlu0 %809
        %v811 = vmul.f32 %v810, %v804
        %v812 = vadd.f32 %v811, 1e-12
        %v813 = vrsqrt.pop %v812
        %v814 = vmul.f32 %v806, %v813
        %v815 = vld [vmem:[%s6] sm:$0x1]
        %v817 = vlaneseq
        %v818 = vshrl.u32 %v817, 7
        %v819 = vsub.s32 0, %v818
        %v820 = vrot.slane %v815, %v819
        %v822 = vmul.f32 %v814, %v820
        %v823 = vld [vmem:[%s7] sm:$0x1]
        %v825 = vlaneseq
        %v826 = vshrl.u32 %v825, 7
        %v827 = vsub.s32 0, %v826
        %v828 = vrot.slane %v823, %v827
        %v830 = vadd.f32 %v822, %v828
        %831 = vst.msk [vmem:[%s362] sm:$0xff] %vm389, %v830
        %s832 = sand.u32 %s208, 1
        %s833 = scalar_lea.sflag [#allocation8], %s832
        %s834 = sand.u32 %s208, 1
        %s835 = smul.addr %s834, 8
        %s836 = scalar_lea.vmem [#allocation14], %s835
        // Predicated region
        $region69: #{tpu_custom_call.1} parent=51 // pred_check
          %p837 = pneg %p218
        $region70: #{tpu_custom_call.1} parent=51 // pred_check_branch
          %839 = sbr.rel (%p837) target = $region72
        $region71: #{tpu_custom_call.1} parent=51 // pred_region
          %s841 = ssub.s32 128, 128
          %842 = vsyncadd %s833, %s841
          %s843 = smul.addr %s27, 128
          %s844 = scalar_lea.hbm %s8, %s843
          %s846 = sshll.u32 %s836, 4
          %s847 = int_to_ptr.vmem [resolvable:$true] %s846
          %849 = dma.vmem_to_hbm [thread:$0]  %s847, 128, %s844, %s833
        $region72: #{tpu_custom_call.1} parent=51 // pred_fallthru
          _
      $region52: #{tpu_custom_call.1} parent=5 // pred_fallthru
        _
      %p850 = scmp.le.s32.totalorder 2, %s22
      // Predicated region
      $region73: #{tpu_custom_call.1} parent=5 // pred_check
        %p851 = pneg %p850
      $region74: #{tpu_custom_call.1} parent=5 // pred_check_branch
        %853 = sbr.rel (%p851) target = $region76
      $region75: #{tpu_custom_call.1} parent=5 // pred_region
        %s854 = ssub.s32 %s22, 2
        // Predicated region
        $region77: #{tpu_custom_call.1} parent=75 // pred_check
          %p855 = pneg %p224
        $region78: #{tpu_custom_call.1} parent=75 // pred_check_branch
          %857 = sbr.rel (%p855) target = $region80
        $region79: #{tpu_custom_call.1} parent=75 // pred_region
          %s858 = sand.u32 %s209, 1
          %s859 = scalar_lea.sflag [#allocation8], %s858
          %s860 = sand.u32 %s209, 1
          %s861 = smul.addr %s860, 8
          %s862 = scalar_lea.vmem [#allocation14], %s861
          %863 = dma.done %s859, 128
        $region80: #{tpu_custom_call.1} parent=75 // pred_fallthru
          _
      $region76: #{tpu_custom_call.1} parent=5 // pred_fallthru
        _
    $region6: #{tpu_custom_call.1} parent=1 // loop_footer
      %s26 = sadd.s32 1, %s22
    $region7: #{tpu_custom_call.1} parent=1 // loop_footer_branch
      %21 = sbr.rel target = $region3
    $region8: #{tpu_custom_call.1} parent=1 // loop_exit
      _
    %864 = vsyncpa [#allocation7], 1
    %s865 = scalar_lea.sflag [#allocation7], 1
    %866 = vsyncpa %s865, 1
    %867 = vsyncpa [#allocation10], 1
    %868 = vsyncpa [#allocation13], 1
    %869 = vsyncpa [#allocation8], 1
    %s870 = scalar_lea.sflag [#allocation8], 1
    %871 = vsyncpa %s870, 1

</llo_original>
